<compile_context>
chip_gen: v7x
topology: tpu7x:2x2x1
jax: 0.10.0
libtpu: 0.0.40
codegen_flags: <defaults>
</compile_context>

<pallas_src>
import functools

import jax
import jax.numpy as jnp
from jax.experimental import pallas as pl
from jax.experimental.pallas import tpu as pltpu


def _round_up(x: int, m: int) -> int:
    return ((x + m - 1) // m) * m


_WEIGHT_BUFS = 1                      # constant-index weights are single-buffered
_VMEM_HEADROOM = 2 * 1024 * 1024      # slack for Mosaic internal scratch


def _vmem_limit_bytes() -> int:
    """Generation-aware scoped-VMEM limit: ~3/4 of physical, capped at 96 MiB
    (v5e/v6e: 128 MiB physical -> 96 MiB; v7x: 64 MiB per TC -> 48 MiB)."""
    try:
        phys = int(pltpu.get_tpu_info().vmem_capacity_bytes)
    except Exception:
        phys = 64 * 1024 * 1024       # conservative (v7x per-core) fallback
    return min((phys * 3) // 4, 96 * 1024 * 1024)


# ---------------------------------------------------------------------------
# Kernel bodies
# ---------------------------------------------------------------------------
def _cls_head_kernel(cls_ref, w1_ref, b1_ref, w2_ref, b2_ref, out_ref):
    """proj2(softplus(proj1(hidden[:, 0, :]))) for one batch tile."""
    # Operands stay in their storage dtype (bf16 goes straight to the MXU);
    # accumulation and the elementwise epilogue are f32.
    rep = jnp.dot(cls_ref[...], w1_ref[...],
                  preferred_element_type=jnp.float32)
    rep = jax.nn.softplus(rep + b1_ref[...].astype(jnp.float32))
    out = jnp.dot(rep.astype(w2_ref.dtype), w2_ref[...],
                  preferred_element_type=jnp.float32)
    out_ref[...] = (out + b2_ref[...].astype(jnp.float32)).astype(out_ref.dtype)


def _pooled_head_kernel(hidden_ref, mask_ref, w1_ref, b1_ref, w2_ref, b2_ref,
                        out_ref, acc_ref, cnt_ref, *, pooling):
    """proj2(pool(softplus(proj1(hidden)))); grid = (batch tile, seq tile)."""
    s_idx = pl.program_id(1)

    @pl.when(s_idx == 0)
    def _init():
        if pooling == "mean":
            acc_ref[...] = jnp.zeros_like(acc_ref)
            cnt_ref[...] = jnp.zeros_like(cnt_ref)
        else:  # max
            acc_ref[...] = jnp.full_like(acc_ref, jnp.finfo(jnp.float32).min)

    hidden = hidden_ref[...]                        # (Bt, St, H), storage dtype
    mask = mask_ref[...].astype(jnp.float32)        # (Bt, St)
    bt, st, h = hidden.shape
    d1 = w1_ref.shape[1]                            # lane-padded D1

    # One large 2-D matmul so the MXU sees M = Bt*St instead of a batched einsum.
    proj = jnp.dot(hidden.reshape(bt * st, h), w1_ref[...],
                   preferred_element_type=jnp.float32)
    proj = jax.nn.softplus(proj + b1_ref[...].astype(jnp.float32))
    proj = proj.reshape(bt, st, d1)                 # (Bt, St, D1p), f32

    m = mask[:, :, None]                            # (Bt, St, 1)
    if pooling == "mean":
        acc_ref[...] += jnp.sum(proj * m, axis=1)
        cnt_ref[...] += jnp.sum(mask, axis=1, keepdims=True)
    else:  # max
        neg_inf = jnp.finfo(jnp.float32).min
        acc_ref[...] = jnp.maximum(
            acc_ref[...], jnp.max(jnp.where(m > 0.0, proj, neg_inf), axis=1))

    @pl.when(s_idx == pl.num_programs(1) - 1)
    def _finalize():
        rep = acc_ref[...]
        if pooling == "mean":
            # Exact divide (matches torch counts.clamp(min=1e-9) semantics).
            rep = rep / jnp.maximum(cnt_ref[...], 1e-9)
        # NOTE: rows whose mask is entirely zero keep acc at float32 min in the
        # max path -- same (garbage) result the PyTorch reference produces, so
        # it is left untouched.  Padded batch rows are sliced off by the caller.
        # Deliberate downcast to the weight dtype (keeps bf16 MXU path); the
        # accumulation of proj2 stays f32.
        out = jnp.dot(rep.astype(w2_ref.dtype), w2_ref[...],
                      preferred_element_type=jnp.float32)
        out_ref[...] = (out + b2_ref[...].astype(jnp.float32)).astype(out_ref.dtype)


# ---------------------------------------------------------------------------
# Tile selection (VMEM-budget aware)
# ---------------------------------------------------------------------------
def _pick_batch_tile(B, target):
    """Batch tile for the cls path: as large as possible up to `target`, but
    keep >= 2 tiles on the parallel axis when the batch allows (v7x megacore)."""
    b8 = max(8, _round_up(B, 8))
    bt = min(target, b8)
    if b8 >= 16 and _round_up(b8, bt) // bt < 2:
        bt = max(8, (b8 // 2) // 8 * 8)
    return bt


def _pooled_vmem_cost(bt, st, H, D1p, Pp, hid_isz, w_isz):
    """Estimated VMEM bytes for one pooled grid step (everything counted)."""
    fixed = (H * D1p + D1p * Pp + D1p + Pp) * w_isz * _WEIGHT_BUFS  # weights
    fixed += 2 * bt * Pp * 4                    # out block (double-buffered)
    fixed += bt * (D1p + 128) * 4               # acc + cnt scratch
    per_s = 2 * bt * H * hid_isz                # hidden block (double-buffered)
    per_s += 2 * bt * 4                         # mask block (double-buffered)
    per_s += bt * H * hid_isz                   # possible reshape copy of hidden
    per_s += 3 * bt * D1p * 4                   # f32 proj + softplus / mask temps
    return fixed + st * per_s


def _pick_pooled_tiles(B, S, H, D1p, Pp, hid_isz, w_isz, budget):
    """Pick (batch_tile, seq_tile, padded_S): largest batch tile (<=128) whose
    blocks + f32 temps + resident weights fit the VMEM budget; seq tile is the
    whole (padded) sequence when it fits, otherwise a multiple of 128."""
    b8 = max(8, _round_up(B, 8))
    s_full = _round_up(S, 8)
    for bt in (128, 64, 32, 16, 8):
        if bt > b8:
            continue
        if b8 >= 16 and _round_up(b8, bt) // bt < 2:
            continue                            # keep both v7x TensorCores busy
        if _pooled_vmem_cost(bt, s_full, H, D1p, Pp, hid_isz, w_isz) <= budget:
            return bt, s_full, s_full           # whole (padded) sequence / step
        if s_full <= 128:
            continue
        fixed = _pooled_vmem_cost(bt, 0, H, D1p, Pp, hid_isz, w_isz)
        per_s = _pooled_vmem_cost(bt, 1, H, D1p, Pp, hid_isz, w_isz) - fixed
        if budget - fixed < 128 * per_s:
            continue                            # even a 128-token tile won't fit
        st_max = ((budget - fixed) // per_s) // 128 * 128
        n_tiles = -(-s_full // st_max)
        st = _round_up(-(-s_full // n_tiles), 128)
        return bt, st, n_tiles * st
    # Nothing fit the budget -> smallest legal tiles (still correct).
    st = s_full if s_full <= 128 else 128
    return 8, st, _round_up(S, st)


# ---------------------------------------------------------------------------
# Wrapper: padding, tiling, pallas_call
# ---------------------------------------------------------------------------
def projected_head(hidden, attention_mask, w1, b1, w2, b2, *, pooling):
    """Pallas head. hidden: (B, S, H); attention_mask: (B, S) -> (B, P) f32."""
    pooling = pooling.lower()
    assert pooling in {"cls", "mean", "max"}
    B, S, H = hidden.shape
    D1 = w1.shape[1]
    P = w2.shape[1]

    # Lane-dense intermediates and output: pad D1 and proj_dim to multiples of
    # 128.  Zero-padded w1 columns / b1 entries make the padded proj columns
    # softplus(0); the matching w2 rows are zero, so the (sliced-back) output
    # is unaffected.
    D1p = _round_up(D1, 128)
    Pp = _round_up(P, 128)
    if D1p != D1:
        w1 = jnp.pad(w1, ((0, 0), (0, D1p - D1)))
        b1 = jnp.pad(b1, (0, D1p - D1))
        w2 = jnp.pad(w2, ((0, D1p - D1), (0, 0)))
    if Pp != P:
        w2 = jnp.pad(w2, ((0, 0), (0, Pp - P)))
        b2 = jnp.pad(b2, (0, Pp - P))
    b1 = b1.reshape(1, D1p)
    b2 = b2.reshape(1, Pp)

    vmem_limit = _vmem_limit_bytes()
    budget = vmem_limit - _VMEM_HEADROOM
    w_isz = w1.dtype.itemsize
    w_bytes = sum(int(a.size) * a.dtype.itemsize for a in (w1, b1, w2, b2))

    def wspec(shape):
        # Constant index_map -> block never changes; single-buffer it to save VMEM.
        return pl.BlockSpec(shape, lambda *idx: (0, 0),
                            pipeline_mode=pl.Buffered(_WEIGHT_BUFS))

    if pooling == "cls":
        bt = _pick_batch_tile(B, 256)           # fill the MXU's native M
        B_pad = _round_up(B, bt)
        # Only token 0 is ever read.  The (B, H) slice is tiny; reading token 0
        # directly from `hidden` via a squeezed BlockSpec would force padding
        # the full (B, S, H) tensor whenever B % bt != 0, so the cheap slice is
        # kept on purpose.
        cls_tok = hidden[:, 0, :]
        if B_pad != B:
            cls_tok = jnp.pad(cls_tok, ((0, B_pad - B), (0, 0)))
        cost = pl.CostEstimate(
            flops=2 * B_pad * H * D1p + 2 * B_pad * D1p * Pp,
            transcendentals=B_pad * D1p,
            bytes_accessed=int(cls_tok.size) * cls_tok.dtype.itemsize
            + w_bytes + B_pad * Pp * 4)
        out = pl.pallas_call(
            _cls_head_kernel,
            out_shape=jax.ShapeDtypeStruct((B_pad, Pp), jnp.float32),
            grid_spec=pltpu.PrefetchScalarGridSpec(
                num_scalar_prefetch=0,
                grid=(B_pad // bt,),
                in_specs=[
                    pl.BlockSpec((bt, H), lambda b: (b, 0)),
                    wspec((H, D1p)),
                    wspec((1, D1p)),
                    wspec((D1p, Pp)),
                    wspec((1, Pp)),
                ],
                out_specs=pl.BlockSpec((bt, Pp), lambda b: (b, 0))),
            compiler_params=pltpu.CompilerParams(
                dimension_semantics=("parallel",),
                vmem_limit_bytes=vmem_limit),
            cost_estimate=cost,
        )(cls_tok, w1, b1, w2, b2)
        return out[:B, :P]

    # mean / max: tile over batch (parallel) and sequence (reduction, last).
    bt, st, S_pad = _pick_pooled_tiles(B, S, H, D1p, Pp,
                                       hidden.dtype.itemsize, w_isz, budget)
    B_pad = _round_up(B, bt)
    mask = attention_mask.astype(jnp.float32)
    if B_pad != B or S_pad != S:
        hidden = jnp.pad(hidden, ((0, B_pad - B), (0, S_pad - S), (0, 0)))
        mask = jnp.pad(mask, ((0, B_pad - B), (0, S_pad - S)))  # pads masked out

    grid = (B_pad // bt, S_pad // st)
    cost = pl.CostEstimate(
        flops=2 * B_pad * S_pad * H * D1p + 2 * B_pad * D1p * Pp,
        transcendentals=B_pad * S_pad * D1p,
        bytes_accessed=int(hidden.size) * hidden.dtype.itemsize
        + int(mask.size) * 4 + w_bytes + B_pad * Pp * 4)
    kernel = functools.partial(_pooled_head_kernel, pooling=pooling)
    out = pl.pallas_call(
        kernel,
        out_shape=jax.ShapeDtypeStruct((B_pad, Pp), jnp.float32),
        grid_spec=pltpu.PrefetchScalarGridSpec(
            num_scalar_prefetch=0,
            grid=grid,
            in_specs=[
                pl.BlockSpec((bt, st, H), lambda b, s: (b, s, 0)),
                pl.BlockSpec((bt, st), lambda b, s: (b, s)),
                wspec((H, D1p)),
                wspec((1, D1p)),
                wspec((D1p, Pp)),
                wspec((1, Pp)),
            ],
            out_specs=pl.BlockSpec((bt, Pp), lambda b, s: (b, 0)),
            scratch_shapes=[pltpu.VMEM((bt, D1p), jnp.float32),   # pool acc
                            pltpu.VMEM((bt, 1), jnp.float32)]),   # mask count
        compiler_params=pltpu.CompilerParams(
            dimension_semantics=("parallel", "arbitrary"),
            vmem_limit_bytes=vmem_limit),
        cost_estimate=cost,
    )(hidden, mask, w1, b1, w2, b2)
    return out[:B, :P]


# ---------------------------------------------------------------------------
# Synthetic "BERT" backbone (plain-JAX glue) + full forward
# ---------------------------------------------------------------------------
# TODO(synk): pretrained transformer encoder (AutoModel) is not reproducible
# here; replaced by a deterministic token + position embedding lookup.
def synthetic_bert_last_hidden(input_ids, tok_emb, pos_emb):
    h = tok_emb[input_ids] + pos_emb[None, : input_ids.shape[1], :]
    return jnp.tanh(h)


def projected_bert_forward(params, input_ids, attention_mask, *, pooling):
    hidden = synthetic_bert_last_hidden(
        input_ids, params["tok_emb"], params["pos_emb"])
    return projected_head(hidden, attention_mask,
                          params["w1"], params["b1"],
                          params["w2"], params["b2"], pooling=pooling)


# Pure-JAX reference of the head (mirrors the PyTorch semantics).
def _ref_head(hidden, mask, w1, b1, w2, b2, pooling):
    if pooling == "cls":
        rep = jax.nn.softplus(hidden[:, 0, :] @ w1 + b1)
    else:
        h = jax.nn.softplus(hidden @ w1 + b1)
        m = mask[:, :, None]
        if pooling == "mean":
            rep = (h * m).sum(axis=1) / jnp.clip(m.sum(axis=1), 1e-9, None)
        else:
            hm = jnp.where(m > 0, h, jnp.finfo(h.dtype).min)
            rep = hm.max(axis=1)
    return rep @ w2 + b2


if __name__ == "__main__":
    # small shapes consistent with the module
    B, S, H, D1, P, V = 2, 8, 32, 64, 16, 100

    key = jax.random.PRNGKey(0)
    ks = jax.random.split(key, 8)
    params = {
        "tok_emb": jax.random.normal(ks[0], (V, H), jnp.float32) * 0.02,
        "pos_emb": jax.random.normal(ks[1], (S, H), jnp.float32) * 0.02,
        "w1": jax.random.normal(ks[2], (H, D1), jnp.float32) * 0.05,
        "b1": jax.random.normal(ks[3], (D1,), jnp.float32) * 0.05,
        "w2": jax.random.normal(ks[4], (D1, P), jnp.float32) * 0.05,
        "b2": jax.random.normal(ks[5], (P,), jnp.float32) * 0.05,
    }

    input_ids = jax.random.randint(ks[6], (B, S), 0, V, dtype=jnp.int32)
    # mask out the last 3 tokens of the second row
    attention_mask = jnp.array(
        [[1] * S, [1] * (S - 3) + [0] * 3], dtype=jnp.float32)

    hidden = synthetic_bert_last_hidden(
        input_ids, params["tok_emb"], params["pos_emb"])

    for pooling in ("cls", "mean", "max"):
        out = projected_bert_forward(params, input_ids, attention_mask,
                                     pooling=pooling)
        out = jax.block_until_ready(out)
        ref = _ref_head(hidden, attention_mask, params["w1"], params["b1"],
                        params["w2"], params["b2"], pooling)
        assert out.shape == (B, P)
        assert jnp.allclose(out, ref, atol=1e-4, rtol=1e-4), pooling

    print("KERNEL_OK")
</pallas_src>

<mosaic_0001>
module attributes {stable_mosaic.version = 11 : i64} {
  func.func @_cls_head_kernel(%arg0: i32, %arg1: memref<8x32xf32, #tpu.memory_space<vmem>>, %arg2: memref<32x128xf32, #tpu.memory_space<vmem>>, %arg3: memref<1x128xf32, #tpu.memory_space<vmem>>, %arg4: memref<128x128xf32, #tpu.memory_space<vmem>>, %arg5: memref<1x128xf32, #tpu.memory_space<vmem>>, %arg6: memref<8x128xf32, #tpu.memory_space<vmem>>) attributes {dimension_semantics = [#tpu.dimension_semantics<parallel>], iteration_bounds = array<i64: 1>, scalar_prefetch = 0 : i64, scratch_operands = 0 : i64, tpu.core_type = #tpu.core_type<tc>, window_params = [{transform_indices = @transform_0, window_bounds = array<i64: 8, 32>}, {pipeline_mode = #tpu.pipeline_mode<synchronous>, transform_indices = @transform_1, window_bounds = array<i64: 32, 128>}, {pipeline_mode = #tpu.pipeline_mode<synchronous>, transform_indices = @transform_2, window_bounds = array<i64: 1, 128>}, {pipeline_mode = #tpu.pipeline_mode<synchronous>, transform_indices = @transform_3, window_bounds = array<i64: 128, 128>}, {pipeline_mode = #tpu.pipeline_mode<synchronous>, transform_indices = @transform_4, window_bounds = array<i64: 1, 128>}, {transform_indices = @transform_5, window_bounds = array<i64: 8, 128>}]} {
    %c0 = arith.constant 0 : index
    %c0_0 = arith.constant 0 : index
    %0 = vector.load %arg1[%c0, %c0_0] : memref<8x32xf32, #tpu.memory_space<vmem>>, vector<8x32xf32>
    %c0_1 = arith.constant 0 : index
    %c0_2 = arith.constant 0 : index
    %1 = vector.load %arg2[%c0_1, %c0_2] : memref<32x128xf32, #tpu.memory_space<vmem>>, vector<32x128xf32>
    %cst = arith.constant dense<0.000000e+00> : vector<8x128xf32>
    %2 = tpu.matmul %0, %1, %cst {dimension_numbers = #tpu.dot_dimension_numbers<[1], [0], [0], [1], [0, 0, 1, 1], [], []>} : vector<8x32xf32>, vector<32x128xf32>, vector<8x128xf32> -> vector<8x128xf32>
    %c0_3 = arith.constant 0 : index
    %c0_4 = arith.constant 0 : index
    %3 = vector.load %arg3[%c0_3, %c0_4] : memref<1x128xf32, #tpu.memory_space<vmem>>, vector<1x128xf32>
    %4 = vector.broadcast %3 : vector<1x128xf32> to vector<8x128xf32>
    %5 = arith.addf %2, %4 : vector<8x128xf32>
    %cst_5 = arith.constant 0.000000e+00 : f32
    %6 = vector.broadcast %cst_5 : f32 to vector<8x128xf32>
    %7 = arith.maximumf %5, %6 : vector<8x128xf32>
    %8 = vector.broadcast %cst_5 : f32 to vector<8x128xf32>
    %9 = arith.subf %5, %8 : vector<8x128xf32>
    %10 = arith.cmpf one, %9, %9 : vector<8x128xf32>
    %11 = vector.broadcast %cst_5 : f32 to vector<8x128xf32>
    %12 = arith.addf %5, %11 : vector<8x128xf32>
    %13 = math.absf %9 : vector<8x128xf32>
    %cst_6 = arith.constant 0.000000e+00 : f32
    %14 = vector.broadcast %cst_6 : f32 to vector<8x128xf32>
    %15 = arith.subf %14, %13 : vector<8x128xf32>
    %16 = math.exp %15 : vector<8x128xf32>
    %17 = math.log1p %16 : vector<8x128xf32>
    %18 = arith.addf %7, %17 : vector<8x128xf32>
    %19 = arith.select %10, %12, %18 : vector<8x128xi1>, vector<8x128xf32>
    %c0_7 = arith.constant 0 : index
    %c0_8 = arith.constant 0 : index
    %20 = vector.load %arg4[%c0_7, %c0_8] : memref<128x128xf32, #tpu.memory_space<vmem>>, vector<128x128xf32>
    %cst_9 = arith.constant dense<0.000000e+00> : vector<8x128xf32>
    %21 = tpu.matmul %19, %20, %cst_9 {dimension_numbers = #tpu.dot_dimension_numbers<[1], [0], [0], [1], [0, 0, 1, 1], [], []>} : vector<8x128xf32>, vector<128x128xf32>, vector<8x128xf32> -> vector<8x128xf32>
    %c0_10 = arith.constant 0 : index
    %c0_11 = arith.constant 0 : index
    %22 = vector.load %arg5[%c0_10, %c0_11] : memref<1x128xf32, #tpu.memory_space<vmem>>, vector<1x128xf32>
    %23 = vector.broadcast %22 : vector<1x128xf32> to vector<8x128xf32>
    %24 = arith.addf %21, %23 : vector<8x128xf32>
    %c0_12 = arith.constant 0 : index
    %c0_13 = arith.constant 0 : index
    %25 = vector.load %arg6[%c0_12, %c0_13] : memref<8x128xf32, #tpu.memory_space<vmem>>, vector<8x128xf32>
    tpu.vector_store %arg6[%c0_12, %c0_13], %24 {strides = array<i32>} : memref<8x128xf32, #tpu.memory_space<vmem>>, vector<8x128xf32>,
    return
  }
  func.func @transform_0(%arg0: i32) -> (i32, i32) {
    %c0_i32 = arith.constant 0 : i32
    %c0_i32_0 = arith.constant 0 : i32
    return %arg0, %c0_i32 : i32, i32
  }
  func.func @transform_1(%arg0: i32) -> (i32, i32) {
    %c0_i32 = arith.constant 0 : i32
    %c0_i32_0 = arith.constant 0 : i32
    %c0_i32_1 = arith.constant 0 : i32
    return %c0_i32, %c0_i32_0 : i32, i32
  }
  func.func @transform_2(%arg0: i32) -> (i32, i32) {
    %c0_i32 = arith.constant 0 : i32
    %c0_i32_0 = arith.constant 0 : i32
    %c0_i32_1 = arith.constant 0 : i32
    return %c0_i32, %c0_i32_0 : i32, i32
  }
  func.func @transform_3(%arg0: i32) -> (i32, i32) {
    %c0_i32 = arith.constant 0 : i32
    %c0_i32_0 = arith.constant 0 : i32
    %c0_i32_1 = arith.constant 0 : i32
    return %c0_i32, %c0_i32_0 : i32, i32
  }
  func.func @transform_4(%arg0: i32) -> (i32, i32) {
    %c0_i32 = arith.constant 0 : i32
    %c0_i32_0 = arith.constant 0 : i32
    %c0_i32_1 = arith.constant 0 : i32
    return %c0_i32, %c0_i32_0 : i32, i32
  }
  func.func @transform_5(%arg0: i32) -> (i32, i32) {
    %c0_i32 = arith.constant 0 : i32
    %c0_i32_0 = arith.constant 0 : i32
    return %arg0, %c0_i32 : i32, i32
  }
}

</mosaic_0001>

<llo_original>
// kernel: tpu_custom_call.1
$region0: #{tpu_custom_call.1}
  #allocation0 [shape = 'u32[]', space=smem, size = 0x4, offset = 0x4, fixed_abs, tag = 'smem constant byte address 0x4 - core index']
  #allocation1 [shape = 'u32[144,128]{1,0:T(1,128)}', space=vmem, size = 0x12000, scoped, tag = 'internal scratch']
  %s0 = inlined_call_operand.hbm [shape: f32[8,32], index: 0, kind: input, shape index: {}]
  %s1 = inlined_call_operand.hbm [shape: f32[32,128], index: 1, kind: input, shape index: {}]
  %s2 = inlined_call_operand.vmem [shape: f32[1,128], index: 2, kind: input, shape index: {}]
  %s3 = inlined_call_operand.hbm [shape: f32[128,128], index: 3, kind: input, shape index: {}]
  %s4 = inlined_call_operand.vmem [shape: f32[1,128], index: 4, kind: input, shape index: {}]
  %s5 = inlined_call_operand.hbm [shape: f32[8,128], index: 5, kind: output, shape index: {}]
  %s6 = sld [smem:[#allocation0]]
  $region42: #{tpu_custom_call.1} parent=0
    _
  %s8 = ssub.s32 1, %s6
  %s9 = scalar_select 0, %s8, %s6
  $region1: #{tpu_custom_call.1} parent=0
    #allocation2 [shape = 'u8[4096]{0}', space=vmem, size = 0x1000, scoped, tag = 'input window, operand 0, single buffered']
    #allocation3 [shape = 's32[1]{0}', space=sflag, size = 0x4, scoped, tag = 'scoped memory for tpu_custom_call.1']
    #allocation4 [shape = 's32[1]{0}', space=sflag, size = 0x4, scoped, tag = 'scoped memory for tpu_custom_call.1']
    #allocation5 [shape = 'u8[16384]{0}', space=vmem, size = 0x4000, scoped, tag = 'input window, operand 1, single buffered']
    #allocation6 [shape = 's32[1]{0}', space=sflag, size = 0x4, scoped, tag = 'scoped memory for tpu_custom_call.1']
    #allocation7 [shape = 'u8[65536]{0}', space=vmem, size = 0x10000, scoped, tag = 'input window, operand 3, single buffered']
    #allocation8 [shape = 'u8[4096]{0}', space=vmem, size = 0x1000, scoped, tag = 'output window, operand 0, single buffered']
    %10 = vsyncpa [#allocation3], 0
    %11 = vsyncpa [#allocation6], 0
    %12 = vsyncpa [#allocation4], 0
    // Predicated region
    $region2: #{tpu_custom_call.1} parent=1 // pred_check
      _
    $region3: #{tpu_custom_call.1} parent=1 // pred_check_branch
      %14 = sbr.rel (0) target = $region5
    $region4: #{tpu_custom_call.1} parent=1 // pred_region
      %s16 = ssub.s32 128, 128
      %17 = vsyncadd [#allocation3], %s16
      %s19 = sshll.u32 [#allocation2], 4
      %s20 = int_to_ptr.vmem [resolvable:$true] %s19
      %22 = dma.hbm_to_vmem [thread:$0]  %s0, 128, %s20, [#allocation3]
    $region5: #{tpu_custom_call.1} parent=1 // pred_fallthru
      _
    // Predicated region
    $region6: #{tpu_custom_call.1} parent=1 // pred_check
      _
    $region7: #{tpu_custom_call.1} parent=1 // pred_check_branch
      %24 = sbr.rel (0) target = $region9
    $region8: #{tpu_custom_call.1} parent=1 // pred_region
      %s26 = ssub.s32 512, 512
      %27 = vsyncadd [#allocation6], %s26
      %s28 = sshll.u32 [#allocation5], 4
      %s29 = int_to_ptr.vmem [resolvable:$true] %s28
      %34 = dma.hbm_to_vmem [thread:$0]  %s1, 512, %s29, [#allocation6], 128, 128, 8
    $region9: #{tpu_custom_call.1} parent=1 // pred_fallthru
      _
    // Predicated region
    $region10: #{tpu_custom_call.1} parent=1 // pred_check
      _
    $region11: #{tpu_custom_call.1} parent=1 // pred_check_branch
      %36 = sbr.rel (0) target = $region13
    $region12: #{tpu_custom_call.1} parent=1 // pred_region
      _
    $region13: #{tpu_custom_call.1} parent=1 // pred_fallthru
      _
    // Predicated region
    $region14: #{tpu_custom_call.1} parent=1 // pred_check
      _
    $region15: #{tpu_custom_call.1} parent=1 // pred_check_branch
      %38 = sbr.rel (0) target = $region17
    $region16: #{tpu_custom_call.1} parent=1 // pred_region
      %s40 = ssub.s32 2048, 2048
      %41 = vsyncadd [#allocation6], %s40
      %s42 = sshll.u32 [#allocation7], 4
      %s43 = int_to_ptr.vmem [resolvable:$true] %s42
      %48 = dma.hbm_to_vmem [thread:$0]  %s3, 2048, %s43, [#allocation6], 128, 128, 8
    $region17: #{tpu_custom_call.1} parent=1 // pred_fallthru
      _
    // Predicated region
    $region18: #{tpu_custom_call.1} parent=1 // pred_check
      _
    $region19: #{tpu_custom_call.1} parent=1 // pred_check_branch
      %50 = sbr.rel (0) target = $region21
    $region20: #{tpu_custom_call.1} parent=1 // pred_region
      _
    $region21: #{tpu_custom_call.1} parent=1 // pred_fallthru
      _
    // Predicated region
    $region22: #{tpu_custom_call.1} parent=1 // pred_check
      _
    $region23: #{tpu_custom_call.1} parent=1 // pred_check_branch
      %52 = sbr.rel (0) target = $region25
    $region24: #{tpu_custom_call.1} parent=1 // pred_region
      %53 = dma.done [#allocation3], 128
    $region25: #{tpu_custom_call.1} parent=1 // pred_fallthru
      _
    // Predicated region
    $region26: #{tpu_custom_call.1} parent=1 // pred_check
      _
    $region27: #{tpu_custom_call.1} parent=1 // pred_check_branch
      %55 = sbr.rel (0) target = $region29
    $region28: #{tpu_custom_call.1} parent=1 // pred_region
      %56 = dma.done [#allocation6], 512
    $region29: #{tpu_custom_call.1} parent=1 // pred_fallthru
      _
    // Predicated region
    $region30: #{tpu_custom_call.1} parent=1 // pred_check
      _
    $region31: #{tpu_custom_call.1} parent=1 // pred_check_branch
      %58 = sbr.rel (0) target = $region33
    $region32: #{tpu_custom_call.1} parent=1 // pred_region
      %59 = dma.done [#allocation6], 2048
    $region33: #{tpu_custom_call.1} parent=1 // pred_fallthru
      _
    %v60 = vld [vmem:[#allocation2] sm:$0xff]
    %v61 = vld [vmem:[#allocation5] sm:$0xff]
    %v62 = vld [vmem:[#allocation5 + $0x8] sm:$0xff]
    %v63 = vld [vmem:[#allocation5 + $0x10] sm:$0xff]
    %v64 = vld [vmem:[#allocation5 + $0x18] sm:$0xff]
    %v65 = vld [vmem:[%s2] sm:$0x1]
    %v67 = vlaneseq
    %v68 = vshrl.u32 %v67, 7
    %v69 = vsub.s32 0, %v68
    %v70 = vrot.slane %v65, %v69
    %vm72 = vcmask 261120
    %v74 = vsel %vm72, %v60, 0
    %76 = vmatprep.subr.mxu0 0.0
    %77 = vmatpush1.msra.mxu0 %v61
    %78 = vmatprep.subr.mxu0 0.0
    %79 = vmatpush1.msra.mxu0 %v62
    %80 = vmatprep.subr.mxu0 0.0
    %81 = vmatpush1.msra.mxu0 %v63
    %82 = vmatprep.subr.mxu0 0.0
    %83 = vmatpush1.msra.mxu0 %v64
    %84 = vmatprep.subr.mxu0 0.0
    %85 = vmatpush1.msra.mxu0 0.0
    %86 = vmatprep.subr.mxu0 0.0
    %87 = vmatpush1.msra.mxu0 0.0
    %88 = vmatprep.subr.mxu0 0.0
    %89 = vmatpush1.msra.mxu0 0.0
    %90 = vmatprep.subr.mxu0 0.0
    %91 = vmatpush1.msra.mxu0 0.0
    %92 = vmatprep.subr.mxu0 0.0
    %93 = vmatpush1.msra.mxu0 0.0
    %94 = vmatprep.subr.mxu0 0.0
    %95 = vmatpush1.msra.mxu0 0.0
    %96 = vmatprep.subr.mxu0 0.0
    %97 = vmatpush1.msra.mxu0 0.0
    %98 = vmatprep.subr.mxu0 0.0
    %99 = vmatpush1.msra.mxu0 0.0
    %100 = vmatprep.subr.mxu0 0.0
    %101 = vmatpush1.msra.mxu0 0.0
    %102 = vmatprep.subr.mxu0 0.0
    %103 = vmatpush1.msra.mxu0 0.0
    %104 = vmatprep.subr.mxu0 0.0
    %105 = vmatpush1.msra.mxu0 0.0
    %106 = vmatprep.subr.mxu0 0.0
    %107 = vmatpush1.msra.mxu0 0.0
    %108 = vmatprep.subr.mxu0 0.0
    %109 = vmatpush1.msra.mxu0 0.0
    %110 = vmatprep.subr.mxu0 0.0
    %111 = vmatpush1.msra.mxu0 0.0
    %112 = vmatprep.subr.mxu0 0.0
    %113 = vmatpush1.msra.mxu0 0.0
    %114 = vmatprep.subr.mxu0 0.0
    %115 = vmatpush1.msra.mxu0 0.0
    %116 = vmatprep.subr.mxu0 0.0
    %117 = vmatpush1.msra.mxu0 0.0
    %118 = vmatprep.subr.mxu0 0.0
    %119 = vmatpush1.msra.mxu0 0.0
    %120 = vmatprep.subr.mxu0 0.0
    %121 = vmatpush1.msra.mxu0 0.0
    %122 = vmatprep.subr.mxu0 0.0
    %123 = vmatpush1.msra.mxu0 0.0
    %124 = vmatprep.subr.mxu0 0.0
    %125 = vmatpush1.msra.mxu0 0.0
    %126 = vmatprep.subr.mxu0 0.0
    %127 = vmatpush1.msra.mxu0 0.0
    %128 = vmatprep.subr.mxu0 0.0
    %129 = vmatpush1.msra.mxu0 0.0
    %130 = vmatprep.subr.mxu0 0.0
    %131 = vmatpush1.msra.mxu0 0.0
    %132 = vmatprep.subr.mxu0 0.0
    %133 = vmatpush1.msra.mxu0 0.0
    %134 = vmatprep.subr.mxu0 0.0
    %135 = vmatpush1.msra.mxu0 0.0
    %136 = vmatprep.subr.mxu0 0.0
    %137 = vmatpush1.msra.mxu0 0.0
    %138 = vmatprep.subr.mxu0 0.0
    %139 = vmatpush1.msra.mxu0 0.0
    %140 = vmatprep.mubr.f32.mxu0 0.0
    %141 = vmatmul.mubr.f32.gmra.mrb[0].mxu0 %v74
    %v142 = vpop.f32.mrb[0].mxu0
    %v143 = vadd.f32 %v70, %v142
    %v144 = vpop.f32.mrb[0].mxu0
    %145 = vdwg.mxu0
    %v146 = vmax.f32 %v143, 0.0
    %vm147 = vcmp.ne.f32.partialorder %v143, %v143
    %v148 = vadd.f32 %v143, 0.0
    %v149 = vand.u32 2147483647, %v143
    %v150 = vsub.f32 0.0, %v149
    %v151 = vmul.f32 %v150, 1.442695
    %v152 = vpow.pop %v151
    %v153 = vadd.f32 %v152, 1.0
    %v154 = vlog2.pop %v153
    %v155 = vmul.f32 %v154, 0.6931472
    %v156 = vmul.f32 -0.5, %v152
    %v157 = vadd.f32 %v156, 1.0
    %v158 = vmul.f32 %v157, %v152
    %v159 = vand.u32 2147483647, %v152
    %vm160 = vcmp.lt.f32.partialorder %v159, 0.0004427343
    %v161 = vsel %vm160, %v158, %v155
    %v162 = vadd.f32 %v146, %v161
    %v163 = vsel %vm147, %v148, %v162
    %v164 = vld [vmem:[#allocation7] sm:$0xff]
    %v165 = vld [vmem:[#allocation7 + $0x8] sm:$0xff]
    %v166 = vld [vmem:[#allocation7 + $0x10] sm:$0xff]
    %v167 = vld [vmem:[#allocation7 + $0x18] sm:$0xff]
    %v168 = vld [vmem:[#allocation7 + $0x20] sm:$0xff]
    %v169 = vld [vmem:[#allocation7 + $0x28] sm:$0xff]
    %v170 = vld [vmem:[#allocation7 + $0x30] sm:$0xff]
    %v171 = vld [vmem:[#allocation7 + $0x38] sm:$0xff]
    %v172 = vld [vmem:[#allocation7 + $0x40] sm:$0xff]
    %v173 = vld [vmem:[#allocation7 + $0x48] sm:$0xff]
    %v174 = vld [vmem:[#allocation7 + $0x50] sm:$0xff]
    %v175 = vld [vmem:[#allocation7 + $0x58] sm:$0xff]
    %v176 = vld [vmem:[#allocation7 + $0x60] sm:$0xff]
    %v177 = vld [vmem:[#allocation7 + $0x68] sm:$0xff]
    %v178 = vld [vmem:[#allocation7 + $0x70] sm:$0xff]
    %v179 = vld [vmem:[#allocation7 + $0x78] sm:$0xff]
    %v180 = vld [vmem:[%s4] sm:$0x1]
    %v182 = vlaneseq
    %v183 = vshrl.u32 %v182, 7
    %v184 = vsub.s32 0, %v183
    %v185 = vrot.slane %v180, %v184
    %187 = vmatprep.subr.mxu0 0.0
    %188 = vmatpush1.msra.mxu0 %v164
    %189 = vmatprep.subr.mxu0 0.0
    %190 = vmatpush1.msra.mxu0 %v165
    %191 = vmatprep.subr.mxu0 0.0
    %192 = vmatpush1.msra.mxu0 %v166
    %193 = vmatprep.subr.mxu0 0.0
    %194 = vmatpush1.msra.mxu0 %v167
    %195 = vmatprep.subr.mxu0 0.0
    %196 = vmatpush1.msra.mxu0 %v168
    %197 = vmatprep.subr.mxu0 0.0
    %198 = vmatpush1.msra.mxu0 %v169
    %199 = vmatprep.subr.mxu0 0.0
    %200 = vmatpush1.msra.mxu0 %v170
    %201 = vmatprep.subr.mxu0 0.0
    %202 = vmatpush1.msra.mxu0 %v171
    %203 = vmatprep.subr.mxu0 0.0
    %204 = vmatpush1.msra.mxu0 %v172
    %205 = vmatprep.subr.mxu0 0.0
    %206 = vmatpush1.msra.mxu0 %v173
    %207 = vmatprep.subr.mxu0 0.0
    %208 = vmatpush1.msra.mxu0 %v174
    %209 = vmatprep.subr.mxu0 0.0
    %210 = vmatpush1.msra.mxu0 %v175
    %211 = vmatprep.subr.mxu0 0.0
    %212 = vmatpush1.msra.mxu0 %v176
    %213 = vmatprep.subr.mxu0 0.0
    %214 = vmatpush1.msra.mxu0 %v177
    %215 = vmatprep.subr.mxu0 0.0
    %216 = vmatpush1.msra.mxu0 %v178
    %217 = vmatprep.subr.mxu0 0.0
    %218 = vmatpush1.msra.mxu0 %v179
    %219 = vmatprep.subr.mxu0 0.0
    %220 = vmatpush1.msra.mxu0 0.0
    %221 = vmatprep.subr.mxu0 0.0
    %222 = vmatpush1.msra.mxu0 0.0
    %223 = vmatprep.subr.mxu0 0.0
    %224 = vmatpush1.msra.mxu0 0.0
    %225 = vmatprep.subr.mxu0 0.0
    %226 = vmatpush1.msra.mxu0 0.0
    %227 = vmatprep.subr.mxu0 0.0
    %228 = vmatpush1.msra.mxu0 0.0
    %229 = vmatprep.subr.mxu0 0.0
    %230 = vmatpush1.msra.mxu0 0.0
    %231 = vmatprep.subr.mxu0 0.0
    %232 = vmatpush1.msra.mxu0 0.0
    %233 = vmatprep.subr.mxu0 0.0
    %234 = vmatpush1.msra.mxu0 0.0
    %235 = vmatprep.subr.mxu0 0.0
    %236 = vmatpush1.msra.mxu0 0.0
    %237 = vmatprep.subr.mxu0 0.0
    %238 = vmatpush1.msra.mxu0 0.0
    %239 = vmatprep.subr.mxu0 0.0
    %240 = vmatpush1.msra.mxu0 0.0
    %241 = vmatprep.subr.mxu0 0.0
    %242 = vmatpush1.msra.mxu0 0.0
    %243 = vmatprep.subr.mxu0 0.0
    %244 = vmatpush1.msra.mxu0 0.0
    %245 = vmatprep.subr.mxu0 0.0
    %246 = vmatpush1.msra.mxu0 0.0
    %247 = vmatprep.subr.mxu0 0.0
    %248 = vmatpush1.msra.mxu0 0.0
    %249 = vmatprep.subr.mxu0 0.0
    %250 = vmatpush1.msra.mxu0 0.0
    %251 = vmatprep.mubr.f32.mxu0 0.0
    %252 = vmatmul.mubr.f32.gmra.mrb[0].mxu0 %v163
    %v253 = vpop.f32.mrb[0].mxu0
    %v254 = vadd.f32 %v185, %v253
    %v255 = vpop.f32.mrb[0].mxu0
    %256 = vdwg.mxu0
    %257 = vst [vmem:[#allocation8] sm:$0xff] %v254
    // Predicated region
    $region34: #{tpu_custom_call.1} parent=1 // pred_check
      _
    $region35: #{tpu_custom_call.1} parent=1 // pred_check_branch
      %259 = sbr.rel (0) target = $region37
    $region36: #{tpu_custom_call.1} parent=1 // pred_region
      %s261 = ssub.s32 128, 128
      %262 = vsyncadd [#allocation4], %s261
      %s264 = sshll.u32 [#allocation8], 4
      %s265 = int_to_ptr.vmem [resolvable:$true] %s264
      %267 = dma.vmem_to_hbm [thread:$0]  %s265, 128, %s5, [#allocation4]
    $region37: #{tpu_custom_call.1} parent=1 // pred_fallthru
      _
    // Predicated region
    $region38: #{tpu_custom_call.1} parent=1 // pred_check
      _
    $region39: #{tpu_custom_call.1} parent=1 // pred_check_branch
      %269 = sbr.rel (0) target = $region41
    $region40: #{tpu_custom_call.1} parent=1 // pred_region
      %270 = dma.done [#allocation4], 128
    $region41: #{tpu_custom_call.1} parent=1 // pred_fallthru
      _
    %271 = vsyncpa [#allocation3], 1
    %272 = vsyncpa [#allocation6], 1
    %273 = vsyncpa [#allocation4], 1

</llo_original>
